<compile_context>
chip_gen: v6e
topology: v6e:2x2x1
jax: 0.10.0
libtpu: 0.0.40
codegen_flags: <defaults>
</compile_context>

<pallas_src>
import jax
import jax.numpy as jnp
from jax import lax
from jax.experimental import pallas as pl
from jax.experimental.pallas import tpu as pltpu


def rnn_last_kernel(ids_ref, emb_proj_ref, whh_ref, out_ref):
    # ids_ref:      [S*B, 1] int32 — token ids, time-major flat (row t*B + b)
    # emb_proj_ref: [V, H]   f32   — embedding table pre-folded with W_ih^T
    # whh_ref:      [H, H]   f32   — recurrent weight W_hh (PyTorch layout)
    # out_ref:      [B, H]   f32   — last-timestep hidden state
    SB = ids_ref.shape[0]
    B, H = out_ref.shape
    V = emb_proj_ref.shape[0]
    S = SB // B

    # --- fused embedding gather + input projection as ONE MXU matmul ---
    # (replaces 16 serial scalar-dependent row loads + 16-way concat + a second matmul)
    ids = ids_ref[...]                                        # [SB, 1]
    cols = lax.broadcasted_iota(jnp.int32, (SB, V), 1)        # [SB, V]
    onehot = (cols == ids).astype(jnp.float32)                # [SB, V]
    x_proj = jnp.dot(onehot, emb_proj_ref[...],
                     preferred_element_type=jnp.float32)      # [SB, H] == x_t @ W_ih^T

    # --- recurrence: tiny [B,H]@[H,H] kept OFF the MXU push/pop path (VPU + XLU) ---
    whh = whh_ref[...]                                        # [H, H]
    h = jnp.zeros((B, H), jnp.float32)
    for t in range(S):                                        # S static & small -> unroll
        xp_t = x_proj[t * B:(t + 1) * B, :]                   # static slice [B, H]
        # (h @ W_hh^T)[b, j] = sum_k h[b, k] * W_hh[j, k]   — broadcast-mul + lane reduce
        hh = jnp.sum(h[:, None, :] * whh[None, :, :], axis=-1)   # [B, H]
        h = jnp.tanh(xp_t + hh)

    out_ref[...] = h


def rnn_forward_pallas(token_ids, emb_proj, w_hh):
    """token_ids: int32 [B, S]; emb_proj: [V, H] (= Embedding @ W_ih^T); w_hh: [H, H].
    Returns the last-timestep hidden state [B, H] (matches PyTorch nn.RNN output[:, -1])."""
    B, S = token_ids.shape
    V, H = emb_proj.shape
    SB = S * B

    # time-major flat ids: row t*B + b  (tiny int reshape in the wrapper)
    ids_tm = jnp.transpose(token_ids).reshape(SB, 1).astype(jnp.int32)

    return pl.pallas_call(
        rnn_last_kernel,
        out_shape=jax.ShapeDtypeStruct((B, H), jnp.float32),
        grid=(1,),
        in_specs=[
            pl.BlockSpec((SB, 1), lambda i: (0, 0)),
            pl.BlockSpec((V, H), lambda i: (0, 0)),
            pl.BlockSpec((H, H), lambda i: (0, 0)),
        ],
        out_specs=pl.BlockSpec((B, H), lambda i: (0, 0)),
        compiler_params=pltpu.CompilerParams(
            dimension_semantics=("arbitrary",),
            vmem_limit_bytes=32 * 1024 * 1024,
        ),
    )(ids_tm, emb_proj, w_hh)


class TorchModelPallas:
    """JAX/Pallas port of TorchModel(vector_dim, sentence_length, vocab)."""

    def __init__(self, vector_dim, sentence_length, vocab_size, key):
        self.D = vector_dim
        self.H = sentence_length  # nn.RNN hidden size == sentence_length
        k_emb, k_ih, k_hh = jax.random.split(key, 3)
        # Deterministic synthetic params (shapes match the PyTorch module).
        self.embedding = jax.random.normal(k_emb, (vocab_size, vector_dim),
                                           jnp.float32)
        bound = 1.0 / jnp.sqrt(jnp.float32(self.H))  # PyTorch RNN default init scale
        self.w_ih = jax.random.uniform(k_ih, (self.H, self.D), jnp.float32,
                                       -bound, bound)
        self.w_hh = jax.random.uniform(k_hh, (self.H, self.H), jnp.float32,
                                       -bound, bound)
        # Weight-only fold, amortized across every forward call:
        # Embedding gather followed by x @ W_ih^T  ==  gather from (Embedding @ W_ih^T).
        self.emb_proj = jnp.dot(self.embedding, self.w_ih.T)          # [V, H]

    def __call__(self, x, y=None):
        # x: int32 [B, S] token ids — gather + projection + RNN all inside the kernel.
        y_pred = rnn_forward_pallas(x, self.emb_proj, self.w_hh)      # [B, H]
        if y is not None:
            # cross_entropy with integer class targets (plain-JAX glue on [B, H])
            logz = jax.nn.logsumexp(y_pred, axis=-1)
            nll = logz - jnp.take_along_axis(y_pred, y[:, None], axis=-1)[:, 0]
            return jnp.mean(nll)
        return y_pred


def _reference_forward(model, x):
    """Pure-JAX reference mirroring nn.RNN math, for sanity check."""
    x_emb = jnp.take(model.embedding, x, axis=0)
    B, S, D = x_emb.shape
    h = jnp.zeros((B, model.H), jnp.float32)
    for t in range(S):
        h = jnp.tanh(x_emb[:, t, :] @ model.w_ih.T + h @ model.w_hh.T)
    return h


if __name__ == "__main__":
    key = jax.random.PRNGKey(0)
    k_model, k_x, k_y = jax.random.split(key, 3)

    vector_dim = 32       # embedding dim
    sentence_length = 8   # seq length == RNN hidden size in this module
    vocab_size = 30
    batch = 2

    model = TorchModelPallas(vector_dim, sentence_length, vocab_size, k_model)

    x = jax.random.randint(k_x, (batch, sentence_length), 0, vocab_size,
                           dtype=jnp.int32)

    y_pred = model(x)                      # [B, sentence_length]
    y_pred = jax.block_until_ready(y_pred)

    ref = jax.block_until_ready(_reference_forward(model, x))
    assert y_pred.shape == (batch, sentence_length)
    assert jnp.allclose(y_pred, ref, atol=1e-5, rtol=1e-5)

    # loss path (y given) exercised once as well
    y = jax.random.randint(k_y, (batch,), 0, sentence_length, dtype=jnp.int32)
    loss = jax.block_until_ready(model(x, y))
    assert loss.shape == ()

    print("KERNEL_OK")
</pallas_src>

<mosaic_0001>
module attributes {stable_mosaic.version = 11 : i64} {
  func.func @rnn_last_kernel(%arg0: i32, %arg1: memref<16x1xi32, #tpu.memory_space<vmem>>, %arg2: memref<30x8xf32, #tpu.memory_space<vmem>>, %arg3: memref<8x8xf32, #tpu.memory_space<vmem>>, %arg4: memref<2x8xf32, #tpu.memory_space<vmem>>) attributes {dimension_semantics = [#tpu.dimension_semantics<arbitrary>], iteration_bounds = array<i64: 1>, scalar_prefetch = 0 : i64, scratch_operands = 0 : i64, tpu.core_type = #tpu.core_type<tc>, window_params = [{pipeline_mode = #tpu.pipeline_mode<synchronous>, transform_indices = @transform_0, window_bounds = array<i64: 16, 1>}, {pipeline_mode = #tpu.pipeline_mode<synchronous>, transform_indices = @transform_1, window_bounds = array<i64: 30, 8>}, {pipeline_mode = #tpu.pipeline_mode<synchronous>, transform_indices = @transform_2, window_bounds = array<i64: 8, 8>}, {pipeline_mode = #tpu.pipeline_mode<synchronous>, transform_indices = @transform_3, window_bounds = array<i64: 2, 8>}]} {
    %c0 = arith.constant 0 : index
    %c0_0 = arith.constant 0 : index
    %0 = vector.load %arg1[%c0, %c0_0] : memref<16x1xi32, #tpu.memory_space<vmem>>, vector<16x1xi32>
    %1 = tpu.iota {dimensions = array<i32: 1>} : vector<16x30xi32>
    %2 = vector.broadcast %0 : vector<16x1xi32> to vector<16x30xi32>
    %3 = arith.cmpi eq, %1, %2 : vector<16x30xi32>
    %4 = arith.extui %3 : vector<16x30xi1> to vector<16x30xi32>
    %5 = arith.sitofp %4 : vector<16x30xi32> to vector<16x30xf32>
    %c0_1 = arith.constant 0 : index
    %c0_2 = arith.constant 0 : index
    %6 = vector.load %arg2[%c0_1, %c0_2] : memref<30x8xf32, #tpu.memory_space<vmem>>, vector<30x8xf32>
    %cst = arith.constant dense<0.000000e+00> : vector<16x8xf32>
    %7 = tpu.matmul %5, %6, %cst {dimension_numbers = #tpu.dot_dimension_numbers<[1], [0], [0], [1], [0, 0, 1, 1], [], []>} : vector<16x30xf32>, vector<30x8xf32>, vector<16x8xf32> -> vector<16x8xf32>
    %c0_3 = arith.constant 0 : index
    %c0_4 = arith.constant 0 : index
    %8 = vector.load %arg3[%c0_3, %c0_4] : memref<8x8xf32, #tpu.memory_space<vmem>>, vector<8x8xf32>
    %cst_5 = arith.constant 0.000000e+00 : f32
    %9 = vector.broadcast %cst_5 : f32 to vector<2x8xf32>
    %10 = vector.extract_strided_slice %7 {offsets = [0, 0], sizes = [2, 8], strides = [1, 1]} : vector<16x8xf32> to vector<2x8xf32>
    %11 = vector.shape_cast %9 : vector<2x8xf32> to vector<2x1x8xf32>
    %12 = vector.shape_cast %8 : vector<8x8xf32> to vector<1x8x8xf32>
    %13 = vector.broadcast %11 : vector<2x1x8xf32> to vector<2x8x8xf32>
    %14 = vector.broadcast %12 : vector<1x8x8xf32> to vector<2x8x8xf32>
    %15 = arith.mulf %13, %14 : vector<2x8x8xf32>
    %cst_6 = arith.constant dense<0.000000e+00> : vector<2x8xf32>
    %16 = vector.multi_reduction <add>, %15, %cst_6 [2] : vector<2x8x8xf32> to vector<2x8xf32>
    %17 = arith.addf %10, %16 : vector<2x8xf32>
    %18 = math.tanh %17 : vector<2x8xf32>
    %19 = vector.extract_strided_slice %7 {offsets = [2, 0], sizes = [2, 8], strides = [1, 1]} : vector<16x8xf32> to vector<2x8xf32>
    %20 = vector.shape_cast %18 : vector<2x8xf32> to vector<2x1x8xf32>
    %21 = vector.shape_cast %8 : vector<8x8xf32> to vector<1x8x8xf32>
    %22 = vector.broadcast %20 : vector<2x1x8xf32> to vector<2x8x8xf32>
    %23 = vector.broadcast %21 : vector<1x8x8xf32> to vector<2x8x8xf32>
    %24 = arith.mulf %22, %23 : vector<2x8x8xf32>
    %cst_7 = arith.constant dense<0.000000e+00> : vector<2x8xf32>
    %25 = vector.multi_reduction <add>, %24, %cst_7 [2] : vector<2x8x8xf32> to vector<2x8xf32>
    %26 = arith.addf %19, %25 : vector<2x8xf32>
    %27 = math.tanh %26 : vector<2x8xf32>
    %28 = vector.extract_strided_slice %7 {offsets = [4, 0], sizes = [2, 8], strides = [1, 1]} : vector<16x8xf32> to vector<2x8xf32>
    %29 = vector.shape_cast %27 : vector<2x8xf32> to vector<2x1x8xf32>
    %30 = vector.shape_cast %8 : vector<8x8xf32> to vector<1x8x8xf32>
    %31 = vector.broadcast %29 : vector<2x1x8xf32> to vector<2x8x8xf32>
    %32 = vector.broadcast %30 : vector<1x8x8xf32> to vector<2x8x8xf32>
    %33 = arith.mulf %31, %32 : vector<2x8x8xf32>
    %cst_8 = arith.constant dense<0.000000e+00> : vector<2x8xf32>
    %34 = vector.multi_reduction <add>, %33, %cst_8 [2] : vector<2x8x8xf32> to vector<2x8xf32>
    %35 = arith.addf %28, %34 : vector<2x8xf32>
    %36 = math.tanh %35 : vector<2x8xf32>
    %37 = vector.extract_strided_slice %7 {offsets = [6, 0], sizes = [2, 8], strides = [1, 1]} : vector<16x8xf32> to vector<2x8xf32>
    %38 = vector.shape_cast %36 : vector<2x8xf32> to vector<2x1x8xf32>
    %39 = vector.shape_cast %8 : vector<8x8xf32> to vector<1x8x8xf32>
    %40 = vector.broadcast %38 : vector<2x1x8xf32> to vector<2x8x8xf32>
    %41 = vector.broadcast %39 : vector<1x8x8xf32> to vector<2x8x8xf32>
    %42 = arith.mulf %40, %41 : vector<2x8x8xf32>
    %cst_9 = arith.constant dense<0.000000e+00> : vector<2x8xf32>
    %43 = vector.multi_reduction <add>, %42, %cst_9 [2] : vector<2x8x8xf32> to vector<2x8xf32>
    %44 = arith.addf %37, %43 : vector<2x8xf32>
    %45 = math.tanh %44 : vector<2x8xf32>
    %46 = vector.extract_strided_slice %7 {offsets = [8, 0], sizes = [2, 8], strides = [1, 1]} : vector<16x8xf32> to vector<2x8xf32>
    %47 = vector.shape_cast %45 : vector<2x8xf32> to vector<2x1x8xf32>
    %48 = vector.shape_cast %8 : vector<8x8xf32> to vector<1x8x8xf32>
    %49 = vector.broadcast %47 : vector<2x1x8xf32> to vector<2x8x8xf32>
    %50 = vector.broadcast %48 : vector<1x8x8xf32> to vector<2x8x8xf32>
    %51 = arith.mulf %49, %50 : vector<2x8x8xf32>
    %cst_10 = arith.constant dense<0.000000e+00> : vector<2x8xf32>
    %52 = vector.multi_reduction <add>, %51, %cst_10 [2] : vector<2x8x8xf32> to vector<2x8xf32>
    %53 = arith.addf %46, %52 : vector<2x8xf32>
    %54 = math.tanh %53 : vector<2x8xf32>
    %55 = vector.extract_strided_slice %7 {offsets = [10, 0], sizes = [2, 8], strides = [1, 1]} : vector<16x8xf32> to vector<2x8xf32>
    %56 = vector.shape_cast %54 : vector<2x8xf32> to vector<2x1x8xf32>
    %57 = vector.shape_cast %8 : vector<8x8xf32> to vector<1x8x8xf32>
    %58 = vector.broadcast %56 : vector<2x1x8xf32> to vector<2x8x8xf32>
    %59 = vector.broadcast %57 : vector<1x8x8xf32> to vector<2x8x8xf32>
    %60 = arith.mulf %58, %59 : vector<2x8x8xf32>
    %cst_11 = arith.constant dense<0.000000e+00> : vector<2x8xf32>
    %61 = vector.multi_reduction <add>, %60, %cst_11 [2] : vector<2x8x8xf32> to vector<2x8xf32>
    %62 = arith.addf %55, %61 : vector<2x8xf32>
    %63 = math.tanh %62 : vector<2x8xf32>
    %64 = vector.extract_strided_slice %7 {offsets = [12, 0], sizes = [2, 8], strides = [1, 1]} : vector<16x8xf32> to vector<2x8xf32>
    %65 = vector.shape_cast %63 : vector<2x8xf32> to vector<2x1x8xf32>
    %66 = vector.shape_cast %8 : vector<8x8xf32> to vector<1x8x8xf32>
    %67 = vector.broadcast %65 : vector<2x1x8xf32> to vector<2x8x8xf32>
    %68 = vector.broadcast %66 : vector<1x8x8xf32> to vector<2x8x8xf32>
    %69 = arith.mulf %67, %68 : vector<2x8x8xf32>
    %cst_12 = arith.constant dense<0.000000e+00> : vector<2x8xf32>
    %70 = vector.multi_reduction <add>, %69, %cst_12 [2] : vector<2x8x8xf32> to vector<2x8xf32>
    %71 = arith.addf %64, %70 : vector<2x8xf32>
    %72 = math.tanh %71 : vector<2x8xf32>
    %73 = vector.extract_strided_slice %7 {offsets = [14, 0], sizes = [2, 8], strides = [1, 1]} : vector<16x8xf32> to vector<2x8xf32>
    %74 = vector.shape_cast %72 : vector<2x8xf32> to vector<2x1x8xf32>
    %75 = vector.shape_cast %8 : vector<8x8xf32> to vector<1x8x8xf32>
    %76 = vector.broadcast %74 : vector<2x1x8xf32> to vector<2x8x8xf32>
    %77 = vector.broadcast %75 : vector<1x8x8xf32> to vector<2x8x8xf32>
    %78 = arith.mulf %76, %77 : vector<2x8x8xf32>
    %cst_13 = arith.constant dense<0.000000e+00> : vector<2x8xf32>
    %79 = vector.multi_reduction <add>, %78, %cst_13 [2] : vector<2x8x8xf32> to vector<2x8xf32>
    %80 = arith.addf %73, %79 : vector<2x8xf32>
    %81 = math.tanh %80 : vector<2x8xf32>
    %c0_14 = arith.constant 0 : index
    %c0_15 = arith.constant 0 : index
    %82 = vector.load %arg4[%c0_14, %c0_15] : memref<2x8xf32, #tpu.memory_space<vmem>>, vector<2x8xf32>
    tpu.vector_store %arg4[%c0_14, %c0_15], %81 {strides = array<i32>} : memref<2x8xf32, #tpu.memory_space<vmem>>, vector<2x8xf32>,
    return
  }
  func.func @transform_0(%arg0: i32) -> (i32, i32) {
    %c0_i32 = arith.constant 0 : i32
    %c0_i32_0 = arith.constant 0 : i32
    %c0_i32_1 = arith.constant 0 : i32
    return %c0_i32, %c0_i32_0 : i32, i32
  }
  func.func @transform_1(%arg0: i32) -> (i32, i32) {
    %c0_i32 = arith.constant 0 : i32
    %c0_i32_0 = arith.constant 0 : i32
    %c0_i32_1 = arith.constant 0 : i32
    return %c0_i32, %c0_i32_0 : i32, i32
  }
  func.func @transform_2(%arg0: i32) -> (i32, i32) {
    %c0_i32 = arith.constant 0 : i32
    %c0_i32_0 = arith.constant 0 : i32
    %c0_i32_1 = arith.constant 0 : i32
    return %c0_i32, %c0_i32_0 : i32, i32
  }
  func.func @transform_3(%arg0: i32) -> (i32, i32) {
    %c0_i32 = arith.constant 0 : i32
    %c0_i32_0 = arith.constant 0 : i32
    %c0_i32_1 = arith.constant 0 : i32
    return %c0_i32, %c0_i32_0 : i32, i32
  }
}

</mosaic_0001>

<llo_original>
// kernel: tpu_custom_call.1
$region0: #{tpu_custom_call.1}
  #allocation0 [shape = 'u32[]', space=smem, size = 0x4, offset = 0x4, fixed_abs, tag = 'smem constant byte address 0x4 - core index']
  #allocation1 [shape = 'u32[144,128]{1,0:T(1,128)}', space=vmem, size = 0x12000, scoped, tag = 'internal scratch']
  %s0 = inlined_call_operand.vmem [shape: s32[16,1], index: 0, kind: input, shape index: {}]
  %s1 = inlined_call_operand.vmem [shape: f32[30,8], index: 1, kind: input, shape index: {}]
  %s2 = inlined_call_operand.vmem [shape: f32[8,8], index: 2, kind: input, shape index: {}]
  %s3 = inlined_call_operand.hbm [shape: f32[2,8], index: 3, kind: output, shape index: {}]
  %s4 = sld [smem:[#allocation0]]
  $region22: #{tpu_custom_call.1} parent=0
    _
  %s6 = ssub.s32 1, %s4
  %s7 = scalar_select 0, %s6, %s4
  $region1: #{tpu_custom_call.1} parent=0
    #allocation2 [shape = 'u8[1024]{0}', space=vmem, size = 0x400, scoped, tag = 'output window, operand 0, single buffered']
    #allocation3 [shape = 's32[1]{0}', space=sflag, size = 0x4, scoped, tag = 'scoped memory for tpu_custom_call.1']
    %8 = vsyncpa [#allocation3], 0
    // Predicated region
    $region2: #{tpu_custom_call.1} parent=1 // pred_check
      _
    $region3: #{tpu_custom_call.1} parent=1 // pred_check_branch
      %10 = sbr.rel (0) target = $region5
    $region4: #{tpu_custom_call.1} parent=1 // pred_region
      _
    $region5: #{tpu_custom_call.1} parent=1 // pred_fallthru
      _
    // Predicated region
    $region6: #{tpu_custom_call.1} parent=1 // pred_check
      _
    $region7: #{tpu_custom_call.1} parent=1 // pred_check_branch
      %12 = sbr.rel (0) target = $region9
    $region8: #{tpu_custom_call.1} parent=1 // pred_region
      _
    $region9: #{tpu_custom_call.1} parent=1 // pred_fallthru
      _
    // Predicated region
    $region10: #{tpu_custom_call.1} parent=1 // pred_check
      _
    $region11: #{tpu_custom_call.1} parent=1 // pred_check_branch
      %14 = sbr.rel (0) target = $region13
    $region12: #{tpu_custom_call.1} parent=1 // pred_region
      _
    $region13: #{tpu_custom_call.1} parent=1 // pred_fallthru
      _
    %v15 = vld [vmem:[%s0] sm:$0xff]
    %v16 = vld [vmem:[%s0 + $0x8] sm:$0xff]
    %v17 = vlaneseq
    %v18 = vand.u32 %v17, 127
    %19 = vset.pattern.permute.xlu0 0
    %20 = vperm.xlu0 %19, %v15
    %v21 = vpop.permute.xlu0 %20
    %22 = vset.pattern.permute.xlu0 0
    %23 = vperm.xlu0 %22, %v16
    %v24 = vpop.permute.xlu0 %23
    %vm25 = vcmp.eq.s32.totalorder %v18, %v21
    %vm26 = vcmp.eq.s32.totalorder %v18, %v24
    %v27 = vsel %vm25, 1, 0
    %v28 = vsel %vm26, 1, 0
    %v29 = vcvt.s32.f32 %v27
    %v30 = vcvt.s32.f32 %v28
    %v31 = vld [vmem:[%s1] sm:$0xff]
    %v32 = vld [vmem:[%s1 + $0x8] sm:$0xff]
    %v33 = vld [vmem:[%s1 + $0x10] sm:$0xff]
    %v34 = vld [vmem:[%s1 + $0x18] sm:$0x3f]
    %vm35 = vcmask 244736
    %v37 = vsel %vm35, %v29, 0
    %v40 = vsel %vm35, %v30, 0
    %vm42 = vcmask 1045504
    %v44 = vsel %vm42, %v34, 0
    %46 = vmatprep.subr.mxu0 0.0
    %47 = vmatpush1.msra.mxu0 0.0
    %48 = vmatprep.subr.mxu0 0.0
    %49 = vmatpush1.msra.mxu0 0.0
    %50 = vmatprep.subr.mxu0 0.0
    %51 = vmatpush1.msra.mxu0 0.0
    %52 = vmatprep.subr.mxu0 0.0
    %53 = vmatpush1.msra.mxu0 0.0
    %54 = vmatprep.subr.mxu0 0.0
    %55 = vmatpush1.msra.mxu0 0.0
    %56 = vmatprep.subr.mxu0 0.0
    %57 = vmatpush1.msra.mxu0 0.0
    %58 = vmatprep.subr.mxu0 0.0
    %59 = vmatpush1.msra.mxu0 0.0
    %60 = vmatprep.subr.mxu0 0.0
    %61 = vmatpush1.msra.mxu0 0.0
    %62 = vmatprep.subr.mxu0 0.0
    %63 = vmatpush1.msra.mxu0 0.0
    %64 = vmatprep.subr.mxu0 0.0
    %65 = vmatpush1.msra.mxu0 0.0
    %66 = vmatprep.subr.mxu0 0.0
    %67 = vmatpush1.msra.mxu0 0.0
    %68 = vmatprep.subr.mxu0 0.0
    %69 = vmatpush1.msra.mxu0 0.0
    %70 = vmatprep.subr.mxu0 0.0
    %71 = vmatpush1.msra.mxu0 %v44
    %72 = vmatprep.subr.mxu0 0.0
    %73 = vmatpush1.msra.mxu0 %v33
    %74 = vmatprep.subr.mxu0 0.0
    %75 = vmatpush1.msra.mxu0 %v32
    %76 = vmatprep.subr.mxu0 0.0
    %77 = vmatpush1.msra.mxu0 %v31
    %78 = vmatprep.subr.mxu0 0.0
    %79 = vmatpush2.msra.mxu0 0.0
    %80 = vmatprep.subr.mxu0 0.0
    %81 = vmatpush2.msra.mxu0 0.0
    %82 = vmatprep.subr.mxu0 0.0
    %83 = vmatpush2.msra.mxu0 0.0
    %84 = vmatprep.subr.mxu0 0.0
    %85 = vmatpush2.msra.mxu0 0.0
    %86 = vmatprep.subr.mxu0 0.0
    %87 = vmatpush2.msra.mxu0 0.0
    %88 = vmatprep.subr.mxu0 0.0
    %89 = vmatpush2.msra.mxu0 0.0
    %90 = vmatprep.subr.mxu0 0.0
    %91 = vmatpush2.msra.mxu0 0.0
    %92 = vmatprep.subr.mxu0 0.0
    %93 = vmatpush2.msra.mxu0 0.0
    %94 = vmatprep.subr.mxu0 0.0
    %95 = vmatpush2.msra.mxu0 0.0
    %96 = vmatprep.subr.mxu0 0.0
    %97 = vmatpush2.msra.mxu0 0.0
    %98 = vmatprep.subr.mxu0 0.0
    %99 = vmatpush2.msra.mxu0 0.0
    %100 = vmatprep.subr.mxu0 0.0
    %101 = vmatpush2.msra.mxu0 0.0
    %102 = vmatprep.subr.mxu0 0.0
    %103 = vmatpush2.msra.mxu0 0.0
    %104 = vmatprep.subr.mxu0 0.0
    %105 = vmatpush2.msra.mxu0 0.0
    %106 = vmatprep.subr.mxu0 0.0
    %107 = vmatpush2.msra.mxu0 0.0
    %108 = vmatprep.subr.mxu0 0.0
    %109 = vmatpush2.msra.mxu0 0.0
    %110 = vmatprep.mubr.f32.mxu0 0.0
    %111 = vmatmul.mubr.f32.gmra.mxu0 %v37
    %v112 = vpop.f32.mrf.mxu0
    %v113 = vadd.f32 0.0, %v112
    %v114 = vpop.f32.mrf.mxu0
    %115 = vmatprep.mubr.f32.mxu0 0.0
    %116 = vmatmul.mubr.f32.gmra.mxu0 %v40
    %v117 = vpop.f32.mrf.mxu0
    %v118 = vadd.f32 0.0, %v117
    %v119 = vpop.f32.mrf.mxu0
    %120 = vdwg.mxu0
    %v121 = vld [vmem:[%s2] sm:$0xff]
    %v122 = vmul.f32 %v121, 0.0
    %vm123 = vcmask 64512
    %v124 = vsel %vm123, %v122, 0.0
    %125 = vadd.xlane.f32.xlu0 %v124
    %v126 = vpop.xlane.xlu0 %125
    %v128 = vlaneseq
    %v129 = vshrl.u32 %v128, 7
    %v130 = vsub.s32 %v18, %v129
    %v131 = vrot.slane %v126, %v130
    %vm132 = vcmask 1041409
    %v134 = vadd.f32 %v113, %v131
    %v135 = vtanh.pop %v134
    %v138 = vunpack.c.l.s4 1966171168
    %v139 = vunpack.c.0.s8 %v138
    %v140 = vlaneseq
    %v141 = vshrl.u32 %v140, 7
    %v142 = vsub.s32 %v139, %v141
    %v143 = vrot.slane %v135, %v142
    %v144 = vcombine.high %v143, %v143
    %v146 = vunpack.c.l.s4 1966171168
    %v147 = vunpack.c.0.s8 %v146
    %v148 = vlaneseq
    %v149 = vshrl.u32 %v148, 7
    %v150 = vsub.s32 %v147, %v149
    %v151 = vrot.slane %v143, %v150
    %v153 = vunpack.c.l.s4 1966171168
    %v154 = vunpack.c.0.s8 %v153
    %v155 = vlaneseq
    %v156 = vshrl.u32 %v155, 7
    %v157 = vsub.s32 %v154, %v156
    %v158 = vrot.slane %v144, %v157
    %v159 = vlaneseq
    %v160 = vshrl.u32 %v159, 7
    %v161 = vsub.s32 0, %v160
    %v162 = vrot.slane %v151, %v161
    %v163 = vlaneseq
    %v164 = vshrl.u32 %v163, 7
    %v165 = vsub.s32 0, %v164
    %v166 = vrot.slane %v158, %v165
    %v169 = vmul.f32 %v162, %v121
    %v170 = vmul.f32 %v166, %v121
    %v171 = vsel %vm123, %v169, 0.0
    %172 = vadd.xlane.f32.xlu0 %v171
    %v173 = vpop.xlane.xlu0 %172
    %v174 = vsel %vm123, %v170, 0.0
    %175 = vadd.xlane.f32.xlu0 %v174
    %v176 = vpop.xlane.xlu0 %175
    %v179 = vlaneseq
    %v180 = vshrl.u32 %v179, 7
    %v181 = vsub.s32 %v18, %v180
    %v182 = vrot.slane %v173, %v181
    %v183 = vlaneseq
    %v184 = vshrl.u32 %v183, 7
    %v185 = vsub.s32 %v18, %v184
    %v186 = vrot.slane %v176, %v185
    %vm187 = vcmask 1043459
    %v188 = vsel %vm187, %v186, %v182
    %v190 = vadd.f32 %v113, %v188
    %v191 = vtanh.pop %v190
    %v194 = vunpack.c.l.s4 1966171168
    %v195 = vunpack.c.0.s8 %v194
    %v196 = vlaneseq
    %v197 = vshrl.u32 %v196, 7
    %v198 = vsub.s32 %v195, %v197
    %v199 = vrot.slane %v191, %v198
    %v200 = vcombine.high %v199, %v199
    %v202 = vunpack.c.l.s4 1966171168
    %v203 = vunpack.c.0.s8 %v202
    %v204 = vlaneseq
    %v205 = vshrl.u32 %v204, 7
    %v206 = vsub.s32 %v203, %v205
    %v207 = vrot.slane %v199, %v206
    %v209 = vunpack.c.l.s4 1966171168
    %v210 = vunpack.c.0.s8 %v209
    %v211 = vlaneseq
    %v212 = vshrl.u32 %v211, 7
    %v213 = vsub.s32 %v210, %v212
    %v214 = vrot.slane %v200, %v213
    %v215 = vcombine.high %v207, %v207
    %v216 = vcombine.high %v214, %v214
    %v217 = vlaneseq
    %v218 = vshrl.u32 %v217, 7
    %v219 = vsub.s32 0, %v218
    %v220 = vrot.slane %v215, %v219
    %v221 = vlaneseq
    %v222 = vshrl.u32 %v221, 7
    %v223 = vsub.s32 0, %v222
    %v224 = vrot.slane %v216, %v223
    %v227 = vmul.f32 %v220, %v121
    %v228 = vmul.f32 %v224, %v121
    %v229 = vsel %vm123, %v227, 0.0
    %230 = vadd.xlane.f32.xlu0 %v229
    %v231 = vpop.xlane.xlu0 %230
    %v232 = vsel %vm123, %v228, 0.0
    %233 = vadd.xlane.f32.xlu0 %v232
    %v234 = vpop.xlane.xlu0 %233
    %v237 = vlaneseq
    %v238 = vshrl.u32 %v237, 7
    %v239 = vsub.s32 %v18, %v238
    %v240 = vrot.slane %v231, %v239
    %v241 = vlaneseq
    %v242 = vshrl.u32 %v241, 7
    %v243 = vsub.s32 %v18, %v242
    %v244 = vrot.slane %v234, %v243
    %vm245 = vcmask 1045509
    %v246 = vsel %vm245, %v244, %v240
    %v248 = vadd.f32 %v113, %v246
    %v249 = vtanh.pop %v248
    %v251 = vcombine.high %v249, %v249
    %v253 = vunpack.c.l.s4 1966171168
    %v254 = vunpack.c.0.s8 %v253
    %v255 = vlaneseq
    %v256 = vshrl.u32 %v255, 7
    %v257 = vsub.s32 %v254, %v256
    %v258 = vrot.slane %v251, %v257
    %v259 = vcombine.high %v258, %v258
    %v261 = vunpack.c.l.s4 1966171168
    %v262 = vunpack.c.0.s8 %v261
    %v263 = vlaneseq
    %v264 = vshrl.u32 %v263, 7
    %v265 = vsub.s32 %v262, %v264
    %v266 = vrot.slane %v258, %v265
    %v268 = vunpack.c.l.s4 1966171168
    %v269 = vunpack.c.0.s8 %v268
    %v270 = vlaneseq
    %v271 = vshrl.u32 %v270, 7
    %v272 = vsub.s32 %v269, %v271
    %v273 = vrot.slane %v259, %v272
    %v274 = vlaneseq
    %v275 = vshrl.u32 %v274, 7
    %v276 = vsub.s32 0, %v275
    %v277 = vrot.slane %v266, %v276
    %v278 = vlaneseq
    %v279 = vshrl.u32 %v278, 7
    %v280 = vsub.s32 0, %v279
    %v281 = vrot.slane %v273, %v280
    %v284 = vmul.f32 %v277, %v121
    %v285 = vmul.f32 %v281, %v121
    %v286 = vsel %vm123, %v284, 0.0
    %287 = vadd.xlane.f32.xlu0 %v286
    %v288 = vpop.xlane.xlu0 %287
    %v289 = vsel %vm123, %v285, 0.0
    %290 = vadd.xlane.f32.xlu0 %v289
    %v291 = vpop.xlane.xlu0 %290
    %v294 = vlaneseq
    %v295 = vshrl.u32 %v294, 7
    %v296 = vsub.s32 %v18, %v295
    %v297 = vrot.slane %v288, %v296
    %v298 = vlaneseq
    %v299 = vshrl.u32 %v298, 7
    %v300 = vsub.s32 %v18, %v299
    %v301 = vrot.slane %v291, %v300
    %vm302 = vcmask 1047559
    %v303 = vsel %vm302, %v301, %v297
    %v305 = vadd.f32 %v113, %v303
    %v306 = vtanh.pop %v305
    %v308 = vcombine.high %v306, %v306
    %v310 = vunpack.c.l.s4 1966171168
    %v311 = vunpack.c.0.s8 %v310
    %v312 = vlaneseq
    %v313 = vshrl.u32 %v312, 7
    %v314 = vsub.s32 %v311, %v313
    %v315 = vrot.slane %v308, %v314
    %v316 = vcombine.high %v315, %v315
    %v318 = vunpack.c.l.s4 1966171168
    %v319 = vunpack.c.0.s8 %v318
    %v320 = vlaneseq
    %v321 = vshrl.u32 %v320, 7
    %v322 = vsub.s32 %v319, %v321
    %v323 = vrot.slane %v315, %v322
    %v325 = vunpack.c.l.s4 1966171168
    %v326 = vunpack.c.0.s8 %v325
    %v327 = vlaneseq
    %v328 = vshrl.u32 %v327, 7
    %v329 = vsub.s32 %v326, %v328
    %v330 = vrot.slane %v316, %v329
    %v331 = vcombine.high %v323, %v323
    %v332 = vcombine.high %v330, %v330
    %v333 = vlaneseq
    %v334 = vshrl.u32 %v333, 7
    %v335 = vsub.s32 0, %v334
    %v336 = vrot.slane %v331, %v335
    %v337 = vlaneseq
    %v338 = vshrl.u32 %v337, 7
    %v339 = vsub.s32 0, %v338
    %v340 = vrot.slane %v332, %v339
    %v343 = vmul.f32 %v336, %v121
    %v344 = vmul.f32 %v340, %v121
    %v345 = vsel %vm123, %v343, 0.0
    %346 = vadd.xlane.f32.xlu0 %v345
    %v347 = vpop.xlane.xlu0 %346
    %v348 = vsel %vm123, %v344, 0.0
    %349 = vadd.xlane.f32.xlu0 %v348
    %v350 = vpop.xlane.xlu0 %349
    %v353 = vlaneseq
    %v354 = vshrl.u32 %v353, 7
    %v355 = vsub.s32 %v18, %v354
    %v356 = vrot.slane %v347, %v355
    %v357 = vlaneseq
    %v358 = vshrl.u32 %v357, 7
    %v359 = vsub.s32 %v18, %v358
    %v360 = vrot.slane %v350, %v359
    %v361 = vsel %vm132, %v360, %v356
    %v363 = vadd.f32 %v118, %v361
    %v364 = vtanh.pop %v363
    %v367 = vunpack.c.l.s4 1966171168
    %v368 = vunpack.c.0.s8 %v367
    %v369 = vlaneseq
    %v370 = vshrl.u32 %v369, 7
    %v371 = vsub.s32 %v368, %v370
    %v372 = vrot.slane %v364, %v371
    %v373 = vcombine.high %v372, %v372
    %v375 = vunpack.c.l.s4 1966171168
    %v376 = vunpack.c.0.s8 %v375
    %v377 = vlaneseq
    %v378 = vshrl.u32 %v377, 7
    %v379 = vsub.s32 %v376, %v378
    %v380 = vrot.slane %v372, %v379
    %v382 = vunpack.c.l.s4 1966171168
    %v383 = vunpack.c.0.s8 %v382
    %v384 = vlaneseq
    %v385 = vshrl.u32 %v384, 7
    %v386 = vsub.s32 %v383, %v385
    %v387 = vrot.slane %v373, %v386
    %v388 = vlaneseq
    %v389 = vshrl.u32 %v388, 7
    %v390 = vsub.s32 0, %v389
    %v391 = vrot.slane %v380, %v390
    %v392 = vlaneseq
    %v393 = vshrl.u32 %v392, 7
    %v394 = vsub.s32 0, %v393
    %v395 = vrot.slane %v387, %v394
    %v398 = vmul.f32 %v391, %v121
    %v399 = vmul.f32 %v395, %v121
    %v400 = vsel %vm123, %v398, 0.0
    %401 = vadd.xlane.f32.xlu0 %v400
    %v402 = vpop.xlane.xlu0 %401
    %v403 = vsel %vm123, %v399, 0.0
    %404 = vadd.xlane.f32.xlu0 %v403
    %v405 = vpop.xlane.xlu0 %404
    %v408 = vlaneseq
    %v409 = vshrl.u32 %v408, 7
    %v410 = vsub.s32 %v18, %v409
    %v411 = vrot.slane %v402, %v410
    %v412 = vlaneseq
    %v413 = vshrl.u32 %v412, 7
    %v414 = vsub.s32 %v18, %v413
    %v415 = vrot.slane %v405, %v414
    %v416 = vsel %vm187, %v415, %v411
    %v418 = vadd.f32 %v118, %v416
    %v419 = vtanh.pop %v418
    %v422 = vunpack.c.l.s4 1966171168
    %v423 = vunpack.c.0.s8 %v422
    %v424 = vlaneseq
    %v425 = vshrl.u32 %v424, 7
    %v426 = vsub.s32 %v423, %v425
    %v427 = vrot.slane %v419, %v426
    %v428 = vcombine.high %v427, %v427
    %v430 = vunpack.c.l.s4 1966171168
    %v431 = vunpack.c.0.s8 %v430
    %v432 = vlaneseq
    %v433 = vshrl.u32 %v432, 7
    %v434 = vsub.s32 %v431, %v433
    %v435 = vrot.slane %v427, %v434
    %v437 = vunpack.c.l.s4 1966171168
    %v438 = vunpack.c.0.s8 %v437
    %v439 = vlaneseq
    %v440 = vshrl.u32 %v439, 7
    %v441 = vsub.s32 %v438, %v440
    %v442 = vrot.slane %v428, %v441
    %v443 = vcombine.high %v435, %v435
    %v444 = vcombine.high %v442, %v442
    %v445 = vlaneseq
    %v446 = vshrl.u32 %v445, 7
    %v447 = vsub.s32 0, %v446
    %v448 = vrot.slane %v443, %v447
    %v449 = vlaneseq
    %v450 = vshrl.u32 %v449, 7
    %v451 = vsub.s32 0, %v450
    %v452 = vrot.slane %v444, %v451
    %v455 = vmul.f32 %v448, %v121
    %v456 = vmul.f32 %v452, %v121
    %v457 = vsel %vm123, %v455, 0.0
    %458 = vadd.xlane.f32.xlu0 %v457
    %v459 = vpop.xlane.xlu0 %458
    %v460 = vsel %vm123, %v456, 0.0
    %461 = vadd.xlane.f32.xlu0 %v460
    %v462 = vpop.xlane.xlu0 %461
    %v465 = vlaneseq
    %v466 = vshrl.u32 %v465, 7
    %v467 = vsub.s32 %v18, %v466
    %v468 = vrot.slane %v459, %v467
    %v469 = vlaneseq
    %v470 = vshrl.u32 %v469, 7
    %v471 = vsub.s32 %v18, %v470
    %v472 = vrot.slane %v462, %v471
    %v473 = vsel %vm245, %v472, %v468
    %v475 = vadd.f32 %v118, %v473
    %v476 = vtanh.pop %v475
    %v478 = vcombine.high %v476, %v476
    %v480 = vunpack.c.l.s4 1966171168
    %v481 = vunpack.c.0.s8 %v480
    %v482 = vlaneseq
    %v483 = vshrl.u32 %v482, 7
    %v484 = vsub.s32 %v481, %v483
    %v485 = vrot.slane %v478, %v484
    %v486 = vcombine.high %v485, %v485
    %v488 = vunpack.c.l.s4 1966171168
    %v489 = vunpack.c.0.s8 %v488
    %v490 = vlaneseq
    %v491 = vshrl.u32 %v490, 7
    %v492 = vsub.s32 %v489, %v491
    %v493 = vrot.slane %v485, %v492
    %v495 = vunpack.c.l.s4 1966171168
    %v496 = vunpack.c.0.s8 %v495
    %v497 = vlaneseq
    %v498 = vshrl.u32 %v497, 7
    %v499 = vsub.s32 %v496, %v498
    %v500 = vrot.slane %v486, %v499
    %v501 = vlaneseq
    %v502 = vshrl.u32 %v501, 7
    %v503 = vsub.s32 0, %v502
    %v504 = vrot.slane %v493, %v503
    %v505 = vlaneseq
    %v506 = vshrl.u32 %v505, 7
    %v507 = vsub.s32 0, %v506
    %v508 = vrot.slane %v500, %v507
    %v511 = vmul.f32 %v504, %v121
    %v512 = vmul.f32 %v508, %v121
    %v513 = vsel %vm123, %v511, 0.0
    %514 = vadd.xlane.f32.xlu0 %v513
    %v515 = vpop.xlane.xlu0 %514
    %v516 = vsel %vm123, %v512, 0.0
    %517 = vadd.xlane.f32.xlu0 %v516
    %v518 = vpop.xlane.xlu0 %517
    %v521 = vlaneseq
    %v522 = vshrl.u32 %v521, 7
    %v523 = vsub.s32 %v18, %v522
    %v524 = vrot.slane %v515, %v523
    %v525 = vlaneseq
    %v526 = vshrl.u32 %v525, 7
    %v527 = vsub.s32 %v18, %v526
    %v528 = vrot.slane %v518, %v527
    %v529 = vsel %vm302, %v528, %v524
    %v531 = vadd.f32 %v118, %v529
    %v532 = vtanh.pop %v531
    %vm533 = vcmask 64518
    %534 = vst.msk [vmem:[#allocation2 - $0x6] sm:$0xc0] %vm533, %v532
    // Predicated region
    $region14: #{tpu_custom_call.1} parent=1 // pred_check
      _
    $region15: #{tpu_custom_call.1} parent=1 // pred_check_branch
      %536 = sbr.rel (0) target = $region17
    $region16: #{tpu_custom_call.1} parent=1 // pred_region
      %s538 = ssub.s32 32, 32
      %539 = vsyncadd [#allocation3], %s538
      %s541 = sshll.u32 [#allocation2], 4
      %s542 = int_to_ptr.vmem [resolvable:$true] %s541
      %544 = dma.vmem_to_hbm [thread:$0]  %s542, 32, %s3, [#allocation3]
    $region17: #{tpu_custom_call.1} parent=1 // pred_fallthru
      _
    // Predicated region
    $region18: #{tpu_custom_call.1} parent=1 // pred_check
      _
    $region19: #{tpu_custom_call.1} parent=1 // pred_check_branch
      %546 = sbr.rel (0) target = $region21
    $region20: #{tpu_custom_call.1} parent=1 // pred_region
      %547 = dma.done [#allocation3], 32
    $region21: #{tpu_custom_call.1} parent=1 // pred_fallthru
      _
    %548 = vsyncpa [#allocation3], 1

</llo_original>
